<compile_context>
chip_gen: v7x
topology: tpu7x:2x2x1
jax: 0.10.0
libtpu: 0.0.40
codegen_flags: <defaults>
</compile_context>

<pallas_src>
import functools

import jax
import jax.numpy as jnp
from jax.experimental import pallas as pl
from jax.experimental.pallas import tpu as pltpu


def _siamese_loss_kernel(pred_ref, tgt_ref, out_ref, *,
                         threshold, n_valid_rows, needs_mask):
    """One grid step: fused Siamese loss over a (block_rows, 128) tile,
    folded into an (8, 128) per-lane/per-sublane partial sum."""
    i = pl.program_id(0)

    p = pred_ref[...].astype(jnp.float32)      # native dtype in HBM, f32 math
    t = tgt_ref[...]

    # Branch masks.  Integer / bool labels compare exactly; float labels are
    # compared against exact 0.0 / 1.0 (same as PyTorch `targets == 1/0`).
    if jnp.issubdtype(t.dtype, jnp.floating):
        tf = t.astype(jnp.float32)
        pos = tf == 1.0
        neg = tf == 0.0
    else:
        ti = t.astype(jnp.int32)
        pos = ti == 1
        neg = ti == 0

    thr = jnp.float32(threshold)
    # Shared-square fused loss (saves VALU ops vs two squared expressions):
    #   targets == 1                    -> (0.5*(1-p))^2 == 1/4 * (1 - p)^2
    #   targets == 0 and p > threshold  -> p^2
    #   otherwise                       -> 0
    q = jnp.where(pos, 0.5 * (1.0 - p), p)
    sel = jnp.logical_or(pos, jnp.logical_and(neg, p > thr))
    loss = jnp.where(sel, q * q, 0.0)

    rows_b, lane = loss.shape

    def _store(x):
        # Fold groups of 8 rows on top of each other: pure vreg-to-vreg VPU
        # adds (the (8,128) trailing dims are exactly one vreg tile), then a
        # single unmasked full-vreg store of the (1, 8, 128) partial.
        part = jnp.sum(x.reshape(rows_b // 8, 8, lane), axis=0)
        out_ref[...] = part.reshape(1, 8, lane)

    if not needs_mask:
        _store(loss)
    else:
        last = pl.num_programs(0) - 1

        @pl.when(i != last)
        def _():
            _store(loss)

        @pl.when(i == last)
        def _():
            # Edge block: rows at/after n_valid_rows are out-of-bounds garbage.
            # (Lane-tail padding inside valid rows is zeros and contributes 0
            # loss by construction, so only a row mask is needed.)
            r = jax.lax.broadcasted_iota(jnp.int32, loss.shape, 0)
            gr = i * rows_b + r
            _store(jnp.where(gr < n_valid_rows, loss, 0.0))


def siamese_loss(pred, targets, threshold, *,
                 tile_rows=None, block_byte_budget=5 * 1024 * 1024):
    """Pallas implementation of SiameseLoss.forward(pred, targets)."""
    lane = 128
    pred = jnp.ravel(pred)
    targets = jnp.ravel(targets)
    n = pred.shape[0]
    if n == 0:
        return jnp.float32(0.0)

    # Lane-dense (rows, 128) view.  Zero padding is correctness-free: padded
    # elements have target == 0 and pred == 0, so the pos branch never fires
    # and the neg branch contributes 0^2 == 0.  Tiny inputs are padded up to
    # one full (32, 128) tile so block shapes stay (32, 128)-aligned.
    rows = max(-(-n // lane), 32)
    n_lane = rows * lane
    if n_lane != n:
        pred = jnp.pad(pred, (0, n_lane - n))
        targets = jnp.pad(targets, (0, n_lane - n))
    pred2 = pred.reshape(rows, lane)
    tgt2 = targets.reshape(rows, lane)

    # Block sizing: big streaming blocks from a ~5 MiB/step input-byte budget
    # (double-buffered ~10 MiB: fits every generation's scoped VMEM), capped
    # so medium inputs still yield >= 2 grid blocks for v7x megacore.
    bytes_per_row = lane * (pred2.dtype.itemsize + tgt2.dtype.itemsize)
    budget_rows = max(32, (int(block_byte_budget) // bytes_per_row) // 32 * 32)
    if tile_rows is not None:
        budget_rows = max(32, (int(tile_rows) // 32) * 32)
    half_rows = ((-(-rows // 2)) + 31) // 32 * 32     # round_up(cdiv(rows,2), 32)
    block_rows = max(32, min(budget_rows, half_rows))  # always <= rows, %32 == 0
    num_blocks = -(-rows // block_rows)
    needs_mask = (rows % block_rows) != 0

    kernel = functools.partial(
        _siamese_loss_kernel,
        threshold=float(threshold),
        n_valid_rows=int(rows),
        needs_mask=bool(needs_mask),
    )

    partials = pl.pallas_call(
        kernel,
        out_shape=jax.ShapeDtypeStruct((num_blocks, 8, lane), jnp.float32),
        grid=(num_blocks,),
        in_specs=[
            pl.BlockSpec((block_rows, lane), lambda i: (i, 0)),
            pl.BlockSpec((block_rows, lane), lambda i: (i, 0)),
        ],
        out_specs=pl.BlockSpec((1, 8, lane), lambda i: (i, 0, 0)),
        compiler_params=pltpu.CompilerParams(
            # Each step writes its own partial block -> fully parallel grid
            # (v7x megacore splits the stream across both TensorCores).
            dimension_semantics=("parallel",),
            # Headroom above v5e's 16 MiB default so large tiles stay portable.
            vmem_limit_bytes=32 * 1024 * 1024,
        ),
    )(pred2, tgt2)

    # Final (tiny) cross-sublane + cross-lane reduction of the per-block partials.
    return jnp.sum(partials, dtype=jnp.float32)


if __name__ == "__main__":
    key = jax.random.PRNGKey(0)
    threshold = 0.3  # SiameseLoss(threshold=0.3)

    def reference(pred, targets, thr):
        p = pred.astype(jnp.float32)
        pos = jnp.sum(jnp.where(targets == 1, 0.25 * (1.0 - p) ** 2, 0.0))
        neg = jnp.sum(jnp.where((targets == 0) & (p > thr), p * p, 0.0))
        return pos + neg

    k1, k2, k3, k4, k5, k6 = jax.random.split(key, 6)

    # Case 1: lane-aligned N, f32 pred, int8 {0,1} labels (preferred low-traffic
    # caller contract), default auto tiling.
    n1 = 4096
    pred1 = jax.random.uniform(k1, (n1,), jnp.float32, minval=-1.0, maxval=1.0)
    tgt1 = (jax.random.uniform(k2, (n1,)) > 0.5).astype(jnp.int8)
    out1 = jax.block_until_ready(siamese_loss(pred1, tgt1, threshold))
    ref1 = reference(pred1, tgt1, threshold)
    assert jnp.allclose(out1, ref1, rtol=1e-5, atol=1e-4), (out1, ref1)

    # Case 2: ragged N, int8 labels, small forced tile -> multi-block grid plus
    # masked edge block (exercises the pl.when row-mask path).
    n2 = 4281
    pred2 = jax.random.uniform(k3, (n2,), jnp.float32, minval=-1.0, maxval=1.0)
    tgt2 = (jax.random.uniform(k4, (n2,)) > 0.5).astype(jnp.int8)
    out2 = jax.block_until_ready(siamese_loss(pred2, tgt2, threshold, tile_rows=32))
    ref2 = reference(pred2, tgt2, threshold)
    assert jnp.allclose(out2, ref2, rtol=1e-5, atol=1e-4), (out2, ref2)

    # Case 3: bf16 pred + float {0,1} labels, ragged N, default tiling
    # (exercises native-bf16 pred path, float-label compare path, and the
    # >=2-block split for medium inputs).
    n3 = 5000
    pred3 = jax.random.uniform(k5, (n3,), jnp.float32,
                               minval=-1.0, maxval=1.0).astype(jnp.bfloat16)
    tgt3 = (jax.random.uniform(k6, (n3,)) > 0.5).astype(jnp.float32)
    out3 = jax.block_until_ready(siamese_loss(pred3, tgt3, threshold))
    ref3 = reference(pred3, tgt3, threshold)
    assert jnp.allclose(out3, ref3, rtol=1e-5, atol=1e-4), (out3, ref3)

    print("KERNEL_OK")
</pallas_src>

<mosaic_0001>
module attributes {stable_mosaic.version = 11 : i64} {
  func.func @_siamese_loss_kernel(%arg0: i32, %arg1: memref<32x128xf32, #tpu.memory_space<vmem>>, %arg2: memref<32x128xi8, #tpu.memory_space<vmem>>, %arg3: memref<1x8x128xf32, #tpu.memory_space<vmem>>) attributes {dimension_semantics = [#tpu.dimension_semantics<parallel>], iteration_bounds = array<i64: 1>, scalar_prefetch = 0 : i64, scratch_operands = 0 : i64, tpu.core_type = #tpu.core_type<tc>, window_params = [{transform_indices = @transform_0, window_bounds = array<i64: 32, 128>}, {transform_indices = @transform_1, window_bounds = array<i64: 32, 128>}, {transform_indices = @transform_2, window_bounds = array<i64: 1, 8, 128>}]} {
    %c0 = arith.constant 0 : index
    %c0_0 = arith.constant 0 : index
    %0 = vector.load %arg1[%c0, %c0_0] : memref<32x128xf32, #tpu.memory_space<vmem>>, vector<32x128xf32>
    %c0_1 = arith.constant 0 : index
    %c0_2 = arith.constant 0 : index
    %1 = vector.load %arg2[%c0_1, %c0_2] : memref<32x128xi8, #tpu.memory_space<vmem>>, vector<32x128xi8>
    %2 = arith.extsi %1 : vector<32x128xi8> to vector<32x128xi32>
    %c1_i32 = arith.constant 1 : i32
    %3 = vector.broadcast %c1_i32 : i32 to vector<32x128xi32>
    %4 = arith.cmpi eq, %2, %3 : vector<32x128xi32>
    %c0_i32 = arith.constant 0 : i32
    %5 = vector.broadcast %c0_i32 : i32 to vector<32x128xi32>
    %6 = arith.cmpi eq, %2, %5 : vector<32x128xi32>
    %cst = arith.constant 1.000000e+00 : f32
    %7 = vector.broadcast %cst : f32 to vector<32x128xf32>
    %8 = arith.subf %7, %0 : vector<32x128xf32>
    %cst_3 = arith.constant 5.000000e-01 : f32
    %9 = vector.broadcast %cst_3 : f32 to vector<32x128xf32>
    %10 = arith.mulf %9, %8 : vector<32x128xf32>
    %11 = arith.select %4, %10, %0 : vector<32x128xi1>, vector<32x128xf32>
    %cst_4 = arith.constant 3.000000e-01 : f32
    %12 = vector.broadcast %cst_4 : f32 to vector<32x128xf32>
    %13 = arith.cmpf ogt, %0, %12 : vector<32x128xf32>
    %14 = arith.andi %6, %13 : vector<32x128xi1>
    %15 = arith.ori %4, %14 : vector<32x128xi1>
    %16 = arith.mulf %11, %11 : vector<32x128xf32>
    %cst_5 = arith.constant 0.000000e+00 : f32
    %17 = vector.broadcast %cst_5 : f32 to vector<32x128xf32>
    %18 = arith.select %15, %16, %17 : vector<32x128xi1>, vector<32x128xf32>
    %19 = vector.shape_cast %18 : vector<32x128xf32> to vector<4x8x128xf32>
    %cst_6 = arith.constant dense<0.000000e+00> : vector<8x128xf32>
    %20 = vector.multi_reduction <add>, %19, %cst_6 [0] : vector<4x8x128xf32> to vector<8x128xf32>
    %21 = vector.shape_cast %20 : vector<8x128xf32> to vector<1x8x128xf32>
    %c0_7 = arith.constant 0 : index
    %c0_8 = arith.constant 0 : index
    %c0_9 = arith.constant 0 : index
    %22 = vector.load %arg3[%c0_7, %c0_8, %c0_9] : memref<1x8x128xf32, #tpu.memory_space<vmem>>, vector<1x8x128xf32>
    tpu.vector_store %arg3[%c0_7, %c0_8, %c0_9], %21 {strides = array<i32>} : memref<1x8x128xf32, #tpu.memory_space<vmem>>, vector<1x8x128xf32>,
    return
  }
  func.func @transform_0(%arg0: i32) -> (i32, i32) {
    %c0_i32 = arith.constant 0 : i32
    %c0_i32_0 = arith.constant 0 : i32
    return %arg0, %c0_i32 : i32, i32
  }
  func.func @transform_1(%arg0: i32) -> (i32, i32) {
    %c0_i32 = arith.constant 0 : i32
    %c0_i32_0 = arith.constant 0 : i32
    return %arg0, %c0_i32 : i32, i32
  }
  func.func @transform_2(%arg0: i32) -> (i32, i32, i32) {
    %c0_i32 = arith.constant 0 : i32
    %c0_i32_0 = arith.constant 0 : i32
    %c0_i32_1 = arith.constant 0 : i32
    return %arg0, %c0_i32, %c0_i32_0 : i32, i32, i32
  }
}

</mosaic_0001>

<llo_original>
// kernel: tpu_custom_call.1
$region0: #{tpu_custom_call.1}
  #allocation0 [shape = 'u32[]', space=smem, size = 0x4, offset = 0x4, fixed_abs, tag = 'smem constant byte address 0x4 - core index']
  #allocation1 [shape = 'u32[144,128]{1,0:T(1,128)}', space=vmem, size = 0x12000, scoped, tag = 'internal scratch']
  %s0 = inlined_call_operand.hbm [shape: f32[32,128], index: 0, kind: input, shape index: {}]
  %s1 = inlined_call_operand.hbm [shape: s8[32,128], index: 1, kind: input, shape index: {}]
  %s2 = inlined_call_operand.hbm [shape: f32[1,8,128], index: 2, kind: output, shape index: {}]
  %s3 = sld [smem:[#allocation0]]
  $region26: #{tpu_custom_call.1} parent=0
    _
  %s5 = ssub.s32 1, %s3
  %s6 = scalar_select 0, %s5, %s3
  $region1: #{tpu_custom_call.1} parent=0
    #allocation2 [shape = 'u8[16384]{0}', space=vmem, size = 0x4000, scoped, tag = 'input window, operand 0, single buffered']
    #allocation3 [shape = 's32[1]{0}', space=sflag, size = 0x4, scoped, tag = 'scoped memory for tpu_custom_call.1']
    #allocation4 [shape = 's32[1]{0}', space=sflag, size = 0x4, scoped, tag = 'scoped memory for tpu_custom_call.1']
    #allocation5 [shape = 'u8[4096]{0}', space=vmem, size = 0x1000, scoped, tag = 'input window, operand 1, single buffered']
    #allocation6 [shape = 's32[1]{0}', space=sflag, size = 0x4, scoped, tag = 'scoped memory for tpu_custom_call.1']
    #allocation7 [shape = 'u8[4096]{0}', space=vmem, size = 0x1000, scoped, tag = 'output window, operand 0, single buffered']
    %7 = vsyncpa [#allocation3], 0
    %8 = vsyncpa [#allocation6], 0
    %9 = vsyncpa [#allocation4], 0
    // Predicated region
    $region2: #{tpu_custom_call.1} parent=1 // pred_check
      _
    $region3: #{tpu_custom_call.1} parent=1 // pred_check_branch
      %11 = sbr.rel (0) target = $region5
    $region4: #{tpu_custom_call.1} parent=1 // pred_region
      %s13 = ssub.s32 512, 512
      %14 = vsyncadd [#allocation3], %s13
      %s15 = sshll.u32 [#allocation2], 4
      %s16 = int_to_ptr.vmem [resolvable:$true] %s15
      %21 = dma.hbm_to_vmem [thread:$0]  %s0, 512, %s16, [#allocation3], 128, 128, 8
    $region5: #{tpu_custom_call.1} parent=1 // pred_fallthru
      _
    // Predicated region
    $region6: #{tpu_custom_call.1} parent=1 // pred_check
      _
    $region7: #{tpu_custom_call.1} parent=1 // pred_check_branch
      %23 = sbr.rel (0) target = $region9
    $region8: #{tpu_custom_call.1} parent=1 // pred_region
      %s25 = ssub.s32 128, 128
      %26 = vsyncadd [#allocation6], %s25
      %s28 = sshll.u32 [#allocation5], 4
      %s29 = int_to_ptr.vmem [resolvable:$true] %s28
      %31 = dma.hbm_to_vmem [thread:$0]  %s1, 128, %s29, [#allocation6]
    $region9: #{tpu_custom_call.1} parent=1 // pred_fallthru
      _
    // Predicated region
    $region10: #{tpu_custom_call.1} parent=1 // pred_check
      _
    $region11: #{tpu_custom_call.1} parent=1 // pred_check_branch
      %33 = sbr.rel (0) target = $region13
    $region12: #{tpu_custom_call.1} parent=1 // pred_region
      %34 = dma.done [#allocation3], 512
    $region13: #{tpu_custom_call.1} parent=1 // pred_fallthru
      _
    // Predicated region
    $region14: #{tpu_custom_call.1} parent=1 // pred_check
      _
    $region15: #{tpu_custom_call.1} parent=1 // pred_check_branch
      %36 = sbr.rel (0) target = $region17
    $region16: #{tpu_custom_call.1} parent=1 // pred_region
      %37 = dma.done [#allocation6], 128
    $region17: #{tpu_custom_call.1} parent=1 // pred_fallthru
      _
    %v38 = vld [vmem:[#allocation2] sm:$0xff]
    %v39 = vld [vmem:[#allocation2 + $0x8] sm:$0xff]
    %v40 = vld [vmem:[#allocation2 + $0x10] sm:$0xff]
    %v41 = vld [vmem:[#allocation2 + $0x18] sm:$0xff]
    %v42 = vld [vmem:[#allocation5] sm:$0xff]
    %v43 = vunpack.c.0.s8 %v42
    %v44 = vunpack.c.1.s8 %v42
    %v45 = vunpack.c.2.s8 %v42
    %v46 = vunpack.c.3.s8 %v42
    %vm47 = vcmp.eq.s32.totalorder %v43, 1
    %vm48 = vcmp.eq.s32.totalorder %v44, 1
    %vm49 = vcmp.eq.s32.totalorder %v45, 1
    %vm50 = vcmp.eq.s32.totalorder %v46, 1
    %vm51 = vcmp.eq.s32.totalorder %v43, 0
    %vm52 = vcmp.eq.s32.totalorder %v44, 0
    %vm53 = vcmp.eq.s32.totalorder %v45, 0
    %vm54 = vcmp.eq.s32.totalorder %v46, 0
    %v55 = vsub.f32 1.0, %v38
    %v56 = vsub.f32 1.0, %v39
    %v57 = vsub.f32 1.0, %v40
    %v58 = vsub.f32 1.0, %v41
    %v59 = vmul.f32 %v55, 0.5
    %v60 = vmul.f32 %v56, 0.5
    %v61 = vmul.f32 %v57, 0.5
    %v62 = vmul.f32 %v58, 0.5
    %v63 = vsel %vm47, %v59, %v38
    %v64 = vsel %vm48, %v60, %v39
    %v65 = vsel %vm49, %v61, %v40
    %v66 = vsel %vm50, %v62, %v41
    %vm67 = vcmp.gt.f32.partialorder %v38, 0.3
    %vm68 = vcmp.gt.f32.partialorder %v39, 0.3
    %vm69 = vcmp.gt.f32.partialorder %v40, 0.3
    %vm70 = vcmp.gt.f32.partialorder %v41, 0.3
    %vm71 = vmand %vm51, %vm67
    %vm72 = vmand %vm52, %vm68
    %vm73 = vmand %vm53, %vm69
    %vm74 = vmand %vm54, %vm70
    %vm75 = vmor %vm47, %vm71
    %vm76 = vmor %vm48, %vm72
    %vm77 = vmor %vm49, %vm73
    %vm78 = vmor %vm50, %vm74
    %v79 = vmul.f32 %v63, %v63
    %v80 = vmul.f32 %v64, %v64
    %v81 = vmul.f32 %v65, %v65
    %v82 = vmul.f32 %v66, %v66
    %v83 = vsel %vm75, %v79, 0.0
    %v84 = vsel %vm76, %v80, 0.0
    %v85 = vsel %vm77, %v81, 0.0
    %v86 = vsel %vm78, %v82, 0.0
    %v87 = vadd.f32 %v83, %v84
    %v88 = vadd.f32 %v87, %v85
    %v89 = vadd.f32 %v88, %v86
    %90 = vst [vmem:[#allocation7] sm:$0xff] %v89
    // Predicated region
    $region18: #{tpu_custom_call.1} parent=1 // pred_check
      _
    $region19: #{tpu_custom_call.1} parent=1 // pred_check_branch
      %92 = sbr.rel (0) target = $region21
    $region20: #{tpu_custom_call.1} parent=1 // pred_region
      %s94 = ssub.s32 128, 128
      %95 = vsyncadd [#allocation4], %s94
      %s97 = sshll.u32 [#allocation7], 4
      %s98 = int_to_ptr.vmem [resolvable:$true] %s97
      %100 = dma.vmem_to_hbm [thread:$0]  %s98, 128, %s2, [#allocation4]
    $region21: #{tpu_custom_call.1} parent=1 // pred_fallthru
      _
    // Predicated region
    $region22: #{tpu_custom_call.1} parent=1 // pred_check
      _
    $region23: #{tpu_custom_call.1} parent=1 // pred_check_branch
      %102 = sbr.rel (0) target = $region25
    $region24: #{tpu_custom_call.1} parent=1 // pred_region
      %103 = dma.done [#allocation4], 128
    $region25: #{tpu_custom_call.1} parent=1 // pred_fallthru
      _
    %104 = vsyncpa [#allocation3], 1
    %105 = vsyncpa [#allocation6], 1
    %106 = vsyncpa [#allocation4], 1

</llo_original>
